<compile_context>
chip_gen: v7x
topology: tpu7x:2x2x1
jax: 0.10.0
libtpu: 0.0.40
codegen_flags: <defaults>
</compile_context>

<pallas_src>
import functools

import jax
import jax.numpy as jnp
from jax.experimental import pallas as pl
from jax.experimental.pallas import tpu as pltpu

BN_EPS = 1e-5
LEAKY_SLOPE = 0.2
HIDDEN = 1024
NEG_LARGE = -1e30  # finite stand-in for -inf: exp() underflows to exactly 0


def qy_z_kernel(x_ref, w1_ref, gamma_ref, beta_ref, w2_ref, out_ref, *, dim_y):
    # ---- Linear 1 (no bias): (B, dim_z) @ (dim_z, 1024) -> (B, 1024) on MXU.
    # bf16 operands (MXU-native on v5e/v6e/v7x), f32 accumulation.
    h = jnp.dot(x_ref[...].astype(jnp.bfloat16), w1_ref[...],
                preferred_element_type=jnp.float32)

    # ---- BatchNorm1d, training-mode batch statistics (biased variance).
    # Single pass: var = E[h^2] - mean^2, folded into one scale/shift FMA.
    inv_b = 1.0 / h.shape[0]
    mean = jnp.sum(h, axis=0, keepdims=True) * inv_b           # (1, 1024)
    mean_sq = jnp.sum(h * h, axis=0, keepdims=True) * inv_b    # (1, 1024)
    var = mean_sq - mean * mean
    inv_std = jax.lax.rsqrt(var + BN_EPS)
    scale = gamma_ref[...] * inv_std                           # (1, 1024)
    shift = beta_ref[...] - mean * scale                       # (1, 1024)
    h = h * scale + shift

    # ---- LeakyReLU(0.2): single mul + max on the VPU.
    h = jnp.maximum(h, LEAKY_SLOPE * h)

    # ---- Linear 2 (no bias): (B, 1024) @ (1024, DY_PAD) -> (B, DY_PAD) on MXU.
    logits = jnp.dot(h.astype(jnp.bfloat16), w2_ref[...],
                     preferred_element_type=jnp.float32)

    # Mask padded lanes (cols >= dim_y) so they contribute exactly 0 after exp.
    col = jax.lax.broadcasted_iota(jnp.int32, logits.shape, 1)
    logits = jnp.where(col < dim_y, logits, NEG_LARGE)

    # ---- Softmax over the lane-dense 128-wide last dim (numerically stable).
    m = jnp.max(logits, axis=-1, keepdims=True)
    e = jnp.exp(logits - m)
    denom = jnp.sum(e, axis=-1, keepdims=True)
    out_ref[...] = (e * pl.reciprocal(denom, approx=False)).astype(out_ref.dtype)


def qy_z_forward(x, w1, gamma, beta, w2):
    B, dim_z = x.shape
    dim_y = w2.shape[1]
    dy_pad = 128 * pl.cdiv(dim_y, 128)  # lane-dense output slab width

    # bf16 weights for the MXU; zero-pad w2 out to the padded lane width.
    w1_b = w1.astype(jnp.bfloat16)
    w2_b = jnp.pad(w2, ((0, 0), (0, dy_pad - dim_y))).astype(jnp.bfloat16)

    flops = 2 * B * dim_z * HIDDEN + 2 * B * HIDDEN * dy_pad
    bytes_accessed = (x.size * 4 + w1_b.size * 2 + gamma.size * 4
                      + beta.size * 4 + w2_b.size * 2 + B * dy_pad * 4)
    # Inputs/outputs (double-buffer headroom) + f32 intermediates + margin.
    vmem_bytes = 4 * bytes_accessed + 6 * B * HIDDEN * 4 + (2 << 20)
    vmem_bytes = min(max(vmem_bytes, 4 << 20), 64 << 20)

    vmem = pl.BlockSpec(memory_space=pltpu.MemorySpace.VMEM)
    pi_padded = pl.pallas_call(
        functools.partial(qy_z_kernel, dim_y=dim_y),
        out_shape=jax.ShapeDtypeStruct((B, dy_pad), jnp.float32),
        in_specs=[vmem, vmem, vmem, vmem, vmem],
        out_specs=vmem,
        compiler_params=pltpu.CompilerParams(vmem_limit_bytes=vmem_bytes),
        cost_estimate=pl.CostEstimate(
            flops=flops,
            transcendentals=B * dy_pad,
            bytes_accessed=bytes_accessed),
    )(x, w1_b, gamma, beta, w2_b)
    # Padded columns have exactly-zero probability; drop them outside the kernel.
    return pi_padded[:, :dim_y]


def init_params(key, dim_z, dim_y):
    k1, k2 = jax.random.split(key)
    # Deterministic synthetic init (Kaiming-uniform-like scaling).
    w1 = jax.random.uniform(
        k1, (dim_z, HIDDEN), jnp.float32,
        minval=-1.0 / jnp.sqrt(dim_z), maxval=1.0 / jnp.sqrt(dim_z))
    w2 = jax.random.uniform(
        k2, (HIDDEN, dim_y), jnp.float32,
        minval=-1.0 / jnp.sqrt(HIDDEN), maxval=1.0 / jnp.sqrt(HIDDEN))
    gamma = jnp.ones((1, HIDDEN), jnp.float32)   # BN weight init = 1
    beta = jnp.zeros((1, HIDDEN), jnp.float32)   # BN bias init = 0
    return w1, gamma, beta, w2


if __name__ == "__main__":
    B, dim_z, dim_y = 8, 64, 10

    key = jax.random.PRNGKey(0)
    kx, kp = jax.random.split(key)
    x = jax.random.normal(kx, (B, dim_z), jnp.float32)
    w1, gamma, beta, w2 = init_params(kp, dim_z, dim_y)

    pi = qy_z_forward(x, w1, gamma, beta, w2)
    jax.block_until_ready(pi)

    # Plain-JAX reference using the same bf16 MXU operands / f32 accumulation.
    h = jnp.dot(x.astype(jnp.bfloat16), w1.astype(jnp.bfloat16),
                preferred_element_type=jnp.float32)
    mu = h.mean(0, keepdims=True)
    var = (h * h).mean(0, keepdims=True) - mu * mu
    hn = (h - mu) * jax.lax.rsqrt(var + BN_EPS) * gamma + beta
    hn = jnp.where(hn >= 0, hn, LEAKY_SLOPE * hn)
    logits = jnp.dot(hn.astype(jnp.bfloat16), w2.astype(jnp.bfloat16),
                     preferred_element_type=jnp.float32)
    ref = jax.nn.softmax(logits, axis=-1)

    assert pi.shape == (B, dim_y)
    assert jnp.allclose(pi, ref, atol=2e-3, rtol=2e-3), float(jnp.max(jnp.abs(pi - ref)))
    assert jnp.allclose(pi.sum(-1), 1.0, atol=1e-4)

    print("KERNEL_OK")
</pallas_src>

<mosaic_0001>
module attributes {stable_mosaic.version = 11 : i64} {
  func.func @qy_z_kernel(%arg0: memref<8x64xf32, #tpu.memory_space<vmem>>, %arg1: memref<64x1024xbf16, #tpu.memory_space<vmem>>, %arg2: memref<1x1024xf32, #tpu.memory_space<vmem>>, %arg3: memref<1x1024xf32, #tpu.memory_space<vmem>>, %arg4: memref<1024x128xbf16, #tpu.memory_space<vmem>>, %arg5: memref<8x128xf32, #tpu.memory_space<vmem>>) attributes {dimension_semantics = [], scalar_prefetch = 0 : i64, scratch_operands = 0 : i64, tpu.core_type = #tpu.core_type<tc>} {
    %c0 = arith.constant 0 : index
    %c0_0 = arith.constant 0 : index
    %0 = vector.load %arg0[%c0, %c0_0] : memref<8x64xf32, #tpu.memory_space<vmem>>, vector<8x64xf32>
    %1 = arith.truncf %0 : vector<8x64xf32> to vector<8x64xbf16>
    %c0_1 = arith.constant 0 : index
    %c0_2 = arith.constant 0 : index
    %2 = vector.load %arg1[%c0_1, %c0_2] : memref<64x1024xbf16, #tpu.memory_space<vmem>>, vector<64x1024xbf16>
    %cst = arith.constant dense<0.000000e+00> : vector<8x1024xf32>
    %3 = tpu.matmul %1, %2, %cst {dimension_numbers = #tpu.dot_dimension_numbers<[1], [0], [0], [1], [0, 0, 1, 1], [], []>} : vector<8x64xbf16>, vector<64x1024xbf16>, vector<8x1024xf32> -> vector<8x1024xf32>
    %cst_3 = arith.constant dense<0.000000e+00> : vector<1024xf32>
    %4 = vector.multi_reduction <add>, %3, %cst_3 [0] : vector<8x1024xf32> to vector<1024xf32>
    %5 = vector.shape_cast %4 : vector<1024xf32> to vector<1x1024xf32>
    %cst_4 = arith.constant 1.250000e-01 : f32
    %6 = vector.broadcast %cst_4 : f32 to vector<1x1024xf32>
    %7 = arith.mulf %5, %6 : vector<1x1024xf32>
    %8 = arith.mulf %3, %3 : vector<8x1024xf32>
    %cst_5 = arith.constant dense<0.000000e+00> : vector<1024xf32>
    %9 = vector.multi_reduction <add>, %8, %cst_5 [0] : vector<8x1024xf32> to vector<1024xf32>
    %10 = vector.shape_cast %9 : vector<1024xf32> to vector<1x1024xf32>
    %cst_6 = arith.constant 1.250000e-01 : f32
    %11 = vector.broadcast %cst_6 : f32 to vector<1x1024xf32>
    %12 = arith.mulf %10, %11 : vector<1x1024xf32>
    %13 = arith.mulf %7, %7 : vector<1x1024xf32>
    %14 = arith.subf %12, %13 : vector<1x1024xf32>
    %cst_7 = arith.constant 9.99999974E-6 : f32
    %15 = vector.broadcast %cst_7 : f32 to vector<1x1024xf32>
    %16 = arith.addf %14, %15 : vector<1x1024xf32>
    %17 = math.rsqrt %16 : vector<1x1024xf32>
    %c0_8 = arith.constant 0 : index
    %c0_9 = arith.constant 0 : index
    %18 = vector.load %arg2[%c0_8, %c0_9] : memref<1x1024xf32, #tpu.memory_space<vmem>>, vector<1x1024xf32>
    %19 = arith.mulf %18, %17 : vector<1x1024xf32>
    %c0_10 = arith.constant 0 : index
    %c0_11 = arith.constant 0 : index
    %20 = vector.load %arg3[%c0_10, %c0_11] : memref<1x1024xf32, #tpu.memory_space<vmem>>, vector<1x1024xf32>
    %21 = arith.mulf %7, %19 : vector<1x1024xf32>
    %22 = arith.subf %20, %21 : vector<1x1024xf32>
    %23 = vector.broadcast %19 : vector<1x1024xf32> to vector<8x1024xf32>
    %24 = arith.mulf %3, %23 : vector<8x1024xf32>
    %25 = vector.broadcast %22 : vector<1x1024xf32> to vector<8x1024xf32>
    %26 = arith.addf %24, %25 : vector<8x1024xf32>
    %cst_12 = arith.constant 2.000000e-01 : f32
    %27 = vector.broadcast %cst_12 : f32 to vector<8x1024xf32>
    %28 = arith.mulf %27, %26 : vector<8x1024xf32>
    %29 = arith.maximumf %26, %28 : vector<8x1024xf32>
    %30 = arith.truncf %29 : vector<8x1024xf32> to vector<8x1024xbf16>
    %c0_13 = arith.constant 0 : index
    %c0_14 = arith.constant 0 : index
    %31 = vector.load %arg4[%c0_13, %c0_14] : memref<1024x128xbf16, #tpu.memory_space<vmem>>, vector<1024x128xbf16>
    %cst_15 = arith.constant dense<0.000000e+00> : vector<8x128xf32>
    %32 = tpu.matmul %30, %31, %cst_15 {dimension_numbers = #tpu.dot_dimension_numbers<[1], [0], [0], [1], [0, 0, 1, 1], [], []>} : vector<8x1024xbf16>, vector<1024x128xbf16>, vector<8x128xf32> -> vector<8x128xf32>
    %33 = tpu.iota {dimensions = array<i32: 1>} : vector<8x128xi32>
    %c10_i32 = arith.constant 10 : i32
    %34 = vector.broadcast %c10_i32 : i32 to vector<8x128xi32>
    %35 = arith.cmpi slt, %33, %34 : vector<8x128xi32>
    %cst_16 = arith.constant -1.000000e+30 : f32
    %36 = vector.broadcast %cst_16 : f32 to vector<8x128xf32>
    %37 = arith.select %35, %32, %36 : vector<8x128xi1>, vector<8x128xf32>
    %cst_17 = arith.constant dense<0xFF800000> : vector<8xf32>
    %38 = vector.multi_reduction <maximumf>, %37, %cst_17 [1] : vector<8x128xf32> to vector<8xf32>
    %39 = vector.shape_cast %38 : vector<8xf32> to vector<8x1xf32>
    %40 = vector.broadcast %39 : vector<8x1xf32> to vector<8x128xf32>
    %41 = arith.subf %37, %40 : vector<8x128xf32>
    %42 = math.exp %41 : vector<8x128xf32>
    %cst_18 = arith.constant dense<0.000000e+00> : vector<8xf32>
    %43 = vector.multi_reduction <add>, %42, %cst_18 [1] : vector<8x128xf32> to vector<8xf32>
    %44 = vector.shape_cast %43 : vector<8xf32> to vector<8x1xf32>
    %45 = tpu.reciprocal %44 : vector<8x1xf32> -> vector<8x1xf32>
    %46 = vector.broadcast %45 : vector<8x1xf32> to vector<8x128xf32>
    %47 = arith.mulf %42, %46 : vector<8x128xf32>
    %c0_19 = arith.constant 0 : index
    %c0_20 = arith.constant 0 : index
    %48 = vector.load %arg5[%c0_19, %c0_20] : memref<8x128xf32, #tpu.memory_space<vmem>>, vector<8x128xf32>
    tpu.vector_store %arg5[%c0_19, %c0_20], %47 {strides = array<i32>} : memref<8x128xf32, #tpu.memory_space<vmem>>, vector<8x128xf32>,
    return
  }
}

</mosaic_0001>

<llo_original>
// kernel: tpu_custom_call.1
$region0: #{tpu_custom_call.1}
  #allocation0 [shape = 'u32[]', space=smem, size = 0x4, offset = 0x4, fixed_abs, tag = 'smem constant byte address 0x4 - core index']
  #allocation1 [shape = 'u32[144,128]{1,0:T(1,128)}', space=vmem, size = 0x12000, scoped, tag = 'internal scratch']
  %s0 = inlined_call_operand.hbm [shape: f32[8,64], index: 0, kind: input, shape index: {}]
  %s1 = inlined_call_operand.hbm [shape: bf16[64,1024], index: 1, kind: input, shape index: {}]
  %s2 = inlined_call_operand.hbm [shape: f32[1,1024], index: 2, kind: input, shape index: {}]
  %s3 = inlined_call_operand.vmem [shape: f32[1,1024], index: 3, kind: input, shape index: {}]
  %s4 = inlined_call_operand.hbm [shape: bf16[1024,128], index: 4, kind: input, shape index: {}]
  %s5 = inlined_call_operand.hbm [shape: f32[8,128], index: 5, kind: output, shape index: {}]
  %s6 = sld [smem:[#allocation0]]
  $region46: #{tpu_custom_call.1} parent=0
    _
  %s8 = ssub.s32 1, %s6
  %s9 = scalar_select 0, %s8, %s6
  $region1: #{tpu_custom_call.1} parent=0
    #allocation2 [shape = 'u8[4096]{0}', space=vmem, size = 0x1000, scoped, tag = 'input window, operand 0, single buffered']
    #allocation3 [shape = 's32[1]{0}', space=sflag, size = 0x4, scoped, tag = 'scoped memory for tpu_custom_call.1']
    #allocation4 [shape = 's32[1]{0}', space=sflag, size = 0x4, scoped, tag = 'scoped memory for tpu_custom_call.1']
    #allocation5 [shape = 'u8[131072]{0}', space=vmem, size = 0x20000, scoped, tag = 'input window, operand 1, single buffered']
    #allocation6 [shape = 's32[1]{0}', space=sflag, size = 0x4, scoped, tag = 'scoped memory for tpu_custom_call.1']
    #allocation7 [shape = 'u8[4096]{0}', space=vmem, size = 0x1000, scoped, tag = 'input window, operand 2, single buffered']
    #allocation8 [shape = 'u8[262144]{0}', space=vmem, size = 0x40000, scoped, tag = 'input window, operand 4, single buffered']
    #allocation9 [shape = 's32[1]{0}', space=sflag, size = 0x4, scoped, tag = 'scoped memory for tpu_custom_call.1']
    #allocation10 [shape = 'u8[4096]{0}', space=vmem, size = 0x1000, scoped, tag = 'output window, operand 0, single buffered']
    %10 = vsyncpa [#allocation3], 0
    %11 = vsyncpa [#allocation6], 0
    %12 = vsyncpa [#allocation9], 0
    %13 = vsyncpa [#allocation4], 0
    // Predicated region
    $region2: #{tpu_custom_call.1} parent=1 // pred_check
      _
    $region3: #{tpu_custom_call.1} parent=1 // pred_check_branch
      %15 = sbr.rel (0) target = $region5
    $region4: #{tpu_custom_call.1} parent=1 // pred_region
      %s17 = ssub.s32 128, 128
      %18 = vsyncadd [#allocation3], %s17
      %s20 = sshll.u32 [#allocation2], 4
      %s21 = int_to_ptr.vmem [resolvable:$true] %s20
      %23 = dma.hbm_to_vmem [thread:$0]  %s0, 128, %s21, [#allocation3]
    $region5: #{tpu_custom_call.1} parent=1 // pred_fallthru
      _
    // Predicated region
    $region6: #{tpu_custom_call.1} parent=1 // pred_check
      _
    $region7: #{tpu_custom_call.1} parent=1 // pred_check_branch
      %25 = sbr.rel (0) target = $region9
    $region8: #{tpu_custom_call.1} parent=1 // pred_region
      %s27 = ssub.s32 4096, 4096
      %28 = vsyncadd [#allocation6], %s27
      %s29 = sshll.u32 [#allocation5], 4
      %s30 = int_to_ptr.vmem [resolvable:$true] %s29
      %35 = dma.hbm_to_vmem [thread:$0]  %s1, 4096, %s30, [#allocation6], 512, 512, 32
    $region9: #{tpu_custom_call.1} parent=1 // pred_fallthru
      _
    // Predicated region
    $region10: #{tpu_custom_call.1} parent=1 // pred_check
      _
    $region11: #{tpu_custom_call.1} parent=1 // pred_check_branch
      %37 = sbr.rel (0) target = $region13
    $region12: #{tpu_custom_call.1} parent=1 // pred_region
      %s39 = ssub.s32 128, 128
      %40 = vsyncadd [#allocation6], %s39
      %s42 = sshll.u32 [#allocation7], 4
      %s43 = int_to_ptr.vmem [resolvable:$true] %s42
      %45 = dma.hbm_to_vmem [thread:$0]  %s2, 128, %s43, [#allocation6]
    $region13: #{tpu_custom_call.1} parent=1 // pred_fallthru
      _
    // Predicated region
    $region14: #{tpu_custom_call.1} parent=1 // pred_check
      _
    $region15: #{tpu_custom_call.1} parent=1 // pred_check_branch
      %47 = sbr.rel (0) target = $region17
    $region16: #{tpu_custom_call.1} parent=1 // pred_region
      _
    $region17: #{tpu_custom_call.1} parent=1 // pred_fallthru
      _
    // Predicated region
    $region18: #{tpu_custom_call.1} parent=1 // pred_check
      _
    $region19: #{tpu_custom_call.1} parent=1 // pred_check_branch
      %49 = sbr.rel (0) target = $region21
    $region20: #{tpu_custom_call.1} parent=1 // pred_region
      %s51 = ssub.s32 8192, 8192
      %52 = vsyncadd [#allocation9], %s51
      %s53 = sshll.u32 [#allocation8], 4
      %s54 = int_to_ptr.vmem [resolvable:$true] %s53
      %59 = dma.hbm_to_vmem [thread:$0]  %s4, 8192, %s54, [#allocation9], 64, 64, 4
    $region21: #{tpu_custom_call.1} parent=1 // pred_fallthru
      _
    // Predicated region
    $region22: #{tpu_custom_call.1} parent=1 // pred_check
      _
    $region23: #{tpu_custom_call.1} parent=1 // pred_check_branch
      %61 = sbr.rel (0) target = $region25
    $region24: #{tpu_custom_call.1} parent=1 // pred_region
      %62 = dma.done [#allocation3], 128
    $region25: #{tpu_custom_call.1} parent=1 // pred_fallthru
      _
    // Predicated region
    $region26: #{tpu_custom_call.1} parent=1 // pred_check
      _
    $region27: #{tpu_custom_call.1} parent=1 // pred_check_branch
      %64 = sbr.rel (0) target = $region29
    $region28: #{tpu_custom_call.1} parent=1 // pred_region
      %65 = dma.done [#allocation6], 4096
    $region29: #{tpu_custom_call.1} parent=1 // pred_fallthru
      _
    // Predicated region
    $region30: #{tpu_custom_call.1} parent=1 // pred_check
      _
    $region31: #{tpu_custom_call.1} parent=1 // pred_check_branch
      %67 = sbr.rel (0) target = $region33
    $region32: #{tpu_custom_call.1} parent=1 // pred_region
      %68 = dma.done [#allocation6], 128
    $region33: #{tpu_custom_call.1} parent=1 // pred_fallthru
      _
    // Predicated region
    $region34: #{tpu_custom_call.1} parent=1 // pred_check
      _
    $region35: #{tpu_custom_call.1} parent=1 // pred_check_branch
      %70 = sbr.rel (0) target = $region37
    $region36: #{tpu_custom_call.1} parent=1 // pred_region
      %71 = dma.done [#allocation9], 8192
    $region37: #{tpu_custom_call.1} parent=1 // pred_fallthru
      _
    %v73 = vld [vmem:[#allocation2] sm:$0xff]
    %v74 = vpack.c.bf16 %v73, %v73
    %v75 = vld [vmem:[#allocation5] sm:$0xff]
    %v76 = vld [vmem:[#allocation5 + $0x8] sm:$0xff]
    %v77 = vld [vmem:[#allocation5 + $0x10] sm:$0xff]
    %v78 = vld [vmem:[#allocation5 + $0x18] sm:$0xff]
    %v79 = vld [vmem:[#allocation5 + $0x20] sm:$0xff]
    %v80 = vld [vmem:[#allocation5 + $0x28] sm:$0xff]
    %v81 = vld [vmem:[#allocation5 + $0x30] sm:$0xff]
    %v82 = vld [vmem:[#allocation5 + $0x38] sm:$0xff]
    %v83 = vld [vmem:[#allocation5 + $0x40] sm:$0xff]
    %v84 = vld [vmem:[#allocation5 + $0x48] sm:$0xff]
    %v85 = vld [vmem:[#allocation5 + $0x50] sm:$0xff]
    %v86 = vld [vmem:[#allocation5 + $0x58] sm:$0xff]
    %v87 = vld [vmem:[#allocation5 + $0x60] sm:$0xff]
    %v88 = vld [vmem:[#allocation5 + $0x68] sm:$0xff]
    %v89 = vld [vmem:[#allocation5 + $0x70] sm:$0xff]
    %v90 = vld [vmem:[#allocation5 + $0x78] sm:$0xff]
    %v91 = vld [vmem:[#allocation5 + $0x80] sm:$0xff]
    %v92 = vld [vmem:[#allocation5 + $0x88] sm:$0xff]
    %v93 = vld [vmem:[#allocation5 + $0x90] sm:$0xff]
    %v94 = vld [vmem:[#allocation5 + $0x98] sm:$0xff]
    %v95 = vld [vmem:[#allocation5 + $0xa0] sm:$0xff]
    %v96 = vld [vmem:[#allocation5 + $0xa8] sm:$0xff]
    %v97 = vld [vmem:[#allocation5 + $0xb0] sm:$0xff]
    %v98 = vld [vmem:[#allocation5 + $0xb8] sm:$0xff]
    %v99 = vld [vmem:[#allocation5 + $0xc0] sm:$0xff]
    %v100 = vld [vmem:[#allocation5 + $0xc8] sm:$0xff]
    %v101 = vld [vmem:[#allocation5 + $0xd0] sm:$0xff]
    %v102 = vld [vmem:[#allocation5 + $0xd8] sm:$0xff]
    %v103 = vld [vmem:[#allocation5 + $0xe0] sm:$0xff]
    %v104 = vld [vmem:[#allocation5 + $0xe8] sm:$0xff]
    %v105 = vld [vmem:[#allocation5 + $0xf0] sm:$0xff]
    %v106 = vld [vmem:[#allocation5 + $0xf8] sm:$0xff]
    %v139 = vunpack.c.l.b16 %v75
    %v140 = vunpack.c.h.b16 %v75
    %v141 = vunpack.c.l.b16 %v76
    %v142 = vunpack.c.h.b16 %v76
    %v143 = vunpack.c.l.b16 %v77
    %v144 = vunpack.c.h.b16 %v77
    %v145 = vunpack.c.l.b16 %v78
    %v146 = vunpack.c.h.b16 %v78
    %v147 = vunpack.c.l.b16 %v79
    %v148 = vunpack.c.h.b16 %v79
    %v149 = vunpack.c.l.b16 %v80
    %v150 = vunpack.c.h.b16 %v80
    %v151 = vunpack.c.l.b16 %v81
    %v152 = vunpack.c.h.b16 %v81
    %v153 = vunpack.c.l.b16 %v82
    %v154 = vunpack.c.h.b16 %v82
    %v155 = vunpack.c.l.b16 %v83
    %v156 = vunpack.c.h.b16 %v83
    %v157 = vunpack.c.l.b16 %v84
    %v158 = vunpack.c.h.b16 %v84
    %v159 = vunpack.c.l.b16 %v85
    %v160 = vunpack.c.h.b16 %v85
    %v161 = vunpack.c.l.b16 %v86
    %v162 = vunpack.c.h.b16 %v86
    %v163 = vunpack.c.l.b16 %v87
    %v164 = vunpack.c.h.b16 %v87
    %v165 = vunpack.c.l.b16 %v88
    %v166 = vunpack.c.h.b16 %v88
    %v167 = vunpack.c.l.b16 %v89
    %v168 = vunpack.c.h.b16 %v89
    %v169 = vunpack.c.l.b16 %v90
    %v170 = vunpack.c.h.b16 %v90
    %v171 = vunpack.c.l.b16 %v91
    %v172 = vunpack.c.h.b16 %v91
    %v173 = vunpack.c.l.b16 %v92
    %v174 = vunpack.c.h.b16 %v92
    %v175 = vunpack.c.l.b16 %v93
    %v176 = vunpack.c.h.b16 %v93
    %v177 = vunpack.c.l.b16 %v94
    %v178 = vunpack.c.h.b16 %v94
    %v179 = vunpack.c.l.b16 %v95
    %v180 = vunpack.c.h.b16 %v95
    %v181 = vunpack.c.l.b16 %v96
    %v182 = vunpack.c.h.b16 %v96
    %v183 = vunpack.c.l.b16 %v97
    %v184 = vunpack.c.h.b16 %v97
    %v185 = vunpack.c.l.b16 %v98
    %v186 = vunpack.c.h.b16 %v98
    %v187 = vunpack.c.l.b16 %v99
    %v188 = vunpack.c.h.b16 %v99
    %v189 = vunpack.c.l.b16 %v100
    %v190 = vunpack.c.h.b16 %v100
    %v191 = vunpack.c.l.b16 %v101
    %v192 = vunpack.c.h.b16 %v101
    %v193 = vunpack.c.l.b16 %v102
    %v194 = vunpack.c.h.b16 %v102
    %v195 = vunpack.c.l.b16 %v103
    %v196 = vunpack.c.h.b16 %v103
    %v197 = vunpack.c.l.b16 %v104
    %v198 = vunpack.c.h.b16 %v104
    %v199 = vunpack.c.l.b16 %v105
    %v200 = vunpack.c.h.b16 %v105
    %v201 = vunpack.c.l.b16 %v106
    %v202 = vunpack.c.h.b16 %v106
    %v203 = vpack.c.b16 %v147, %v139
    %v204 = vpack.c.b16 %v148, %v140
    %v205 = vpack.c.b16 %v149, %v141
    %v206 = vpack.c.b16 %v150, %v142
    %v207 = vpack.c.b16 %v151, %v143
    %v208 = vpack.c.b16 %v152, %v144
    %v209 = vpack.c.b16 %v153, %v145
    %v210 = vpack.c.b16 %v154, %v146
    %v211 = vpack.c.b16 %v163, %v155
    %v212 = vpack.c.b16 %v164, %v156
    %v213 = vpack.c.b16 %v165, %v157
    %v214 = vpack.c.b16 %v166, %v158
    %v215 = vpack.c.b16 %v167, %v159
    %v216 = vpack.c.b16 %v168, %v160
    %v217 = vpack.c.b16 %v169, %v161
    %v218 = vpack.c.b16 %v170, %v162
    %v219 = vpack.c.b16 %v179, %v171
    %v220 = vpack.c.b16 %v180, %v172
    %v221 = vpack.c.b16 %v181, %v173
    %v222 = vpack.c.b16 %v182, %v174
    %v223 = vpack.c.b16 %v183, %v175
    %v224 = vpack.c.b16 %v184, %v176
    %v225 = vpack.c.b16 %v185, %v177
    %v226 = vpack.c.b16 %v186, %v178
    %v227 = vpack.c.b16 %v195, %v187
    %v228 = vpack.c.b16 %v196, %v188
    %v229 = vpack.c.b16 %v197, %v189
    %v230 = vpack.c.b16 %v198, %v190
    %v231 = vpack.c.b16 %v199, %v191
    %v232 = vpack.c.b16 %v200, %v192
    %v233 = vpack.c.b16 %v201, %v193
    %v234 = vpack.c.b16 %v202, %v194
    %vm267 = vcmask 523264
    %v269 = vsel %vm267, %v74, 0
    %271 = vmatprep.subr.bf16.mxu0 %v204
    %272 = vmatpush1.bf16.msra.mxu0 %v203
    %273 = vmatprep.subr.bf16.mxu0 %v212
    %274 = vmatpush1.bf16.msra.mxu0 %v211
    %275 = vmatprep.subr.bf16.mxu0 %v220
    %276 = vmatpush1.bf16.msra.mxu0 %v219
    %277 = vmatprep.subr.bf16.mxu0 %v228
    %278 = vmatpush1.bf16.msra.mxu0 %v227
    %279 = vmatprep.subr.bf16.mxu0 0
    %280 = vmatpush1.bf16.msra.mxu0 0
    %281 = vmatprep.subr.bf16.mxu0 0
    %282 = vmatpush1.bf16.msra.mxu0 0
    %283 = vmatprep.subr.bf16.mxu0 0
    %284 = vmatpush1.bf16.msra.mxu0 0
    %285 = vmatprep.subr.bf16.mxu0 0
    %286 = vmatpush1.bf16.msra.mxu0 0
    %287 = vmatprep.subr.bf16.mxu0 0
    %288 = vmatpush1.bf16.msra.mxu0 0
    %289 = vmatprep.subr.bf16.mxu0 0
    %290 = vmatpush1.bf16.msra.mxu0 0
    %291 = vmatprep.subr.bf16.mxu0 0
    %292 = vmatpush1.bf16.msra.mxu0 0
    %293 = vmatprep.subr.bf16.mxu0 0
    %294 = vmatpush1.bf16.msra.mxu0 0
    %295 = vmatprep.subr.bf16.mxu0 0
    %296 = vmatpush1.bf16.msra.mxu0 0
    %297 = vmatprep.subr.bf16.mxu0 0
    %298 = vmatpush1.bf16.msra.mxu0 0
    %299 = vmatprep.subr.bf16.mxu0 0
    %300 = vmatpush1.bf16.msra.mxu0 0
    %301 = vmatprep.subr.bf16.mxu0 0
    %302 = vmatpush1.bf16.msra.mxu0 0
    %303 = vmatprep.mubr.bf16.mxu0 0
    %304 = vmatmul.mubr.bf16.gmra.mrb[0].mxu0 %v269
    %v305 = vpop.f32.mrb[0].mxu0
    %v306 = vadd.f32 0.0, %v305
    %v307 = vpop.f32.mrb[0].mxu0
    %v308 = vadd.f32 0.0, %v307
    %v309 = vpop.f32.mrb[0].mxu0
    %v310 = vpop.f32.mrb[0].mxu0
    %311 = vdwg.mxu0
    %312 = vmatprep.subr.bf16.mxu0 %v206
    %313 = vmatpush1.bf16.msra.mxu0 %v205
    %314 = vmatprep.subr.bf16.mxu0 %v214
    %315 = vmatpush1.bf16.msra.mxu0 %v213
    %316 = vmatprep.subr.bf16.mxu0 %v222
    %317 = vmatpush1.bf16.msra.mxu0 %v221
    %318 = vmatprep.subr.bf16.mxu0 %v230
    %319 = vmatpush1.bf16.msra.mxu0 %v229
    %320 = vmatprep.subr.bf16.mxu0 0
    %321 = vmatpush1.bf16.msra.mxu0 0
    %322 = vmatprep.subr.bf16.mxu0 0
    %323 = vmatpush1.bf16.msra.mxu0 0
    %324 = vmatprep.subr.bf16.mxu0 0
    %325 = vmatpush1.bf16.msra.mxu0 0
    %326 = vmatprep.subr.bf16.mxu0 0
    %327 = vmatpush1.bf16.msra.mxu0 0
    %328 = vmatprep.subr.bf16.mxu0 0
    %329 = vmatpush1.bf16.msra.mxu0 0
    %330 = vmatprep.subr.bf16.mxu0 0
    %331 = vmatpush1.bf16.msra.mxu0 0
    %332 = vmatprep.subr.bf16.mxu0 0
    %333 = vmatpush1.bf16.msra.mxu0 0
    %334 = vmatprep.subr.bf16.mxu0 0
    %335 = vmatpush1.bf16.msra.mxu0 0
    %336 = vmatprep.subr.bf16.mxu0 0
    %337 = vmatpush1.bf16.msra.mxu0 0
    %338 = vmatprep.subr.bf16.mxu0 0
    %339 = vmatpush1.bf16.msra.mxu0 0
    %340 = vmatprep.subr.bf16.mxu0 0
    %341 = vmatpush1.bf16.msra.mxu0 0
    %342 = vmatprep.subr.bf16.mxu0 0
    %343 = vmatpush1.bf16.msra.mxu0 0
    %344 = vmatprep.mubr.bf16.mxu0 0
    %345 = vmatmul.mubr.bf16.gmra.mrb[0].mxu0 %v269
    %v346 = vpop.f32.mrb[0].mxu0
    %v347 = vadd.f32 0.0, %v346
    %v348 = vpop.f32.mrb[0].mxu0
    %v349 = vadd.f32 0.0, %v348
    %v350 = vpop.f32.mrb[0].mxu0
    %v351 = vpop.f32.mrb[0].mxu0
    %352 = vdwg.mxu0
    %353 = vmatprep.subr.bf16.mxu0 %v208
    %354 = vmatpush1.bf16.msra.mxu0 %v207
    %355 = vmatprep.subr.bf16.mxu0 %v216
    %356 = vmatpush1.bf16.msra.mxu0 %v215
    %357 = vmatprep.subr.bf16.mxu0 %v224
    %358 = vmatpush1.bf16.msra.mxu0 %v223
    %359 = vmatprep.subr.bf16.mxu0 %v232
    %360 = vmatpush1.bf16.msra.mxu0 %v231
    %361 = vmatprep.subr.bf16.mxu0 0
    %362 = vmatpush1.bf16.msra.mxu0 0
    %363 = vmatprep.subr.bf16.mxu0 0
    %364 = vmatpush1.bf16.msra.mxu0 0
    %365 = vmatprep.subr.bf16.mxu0 0
    %366 = vmatpush1.bf16.msra.mxu0 0
    %367 = vmatprep.subr.bf16.mxu0 0
    %368 = vmatpush1.bf16.msra.mxu0 0
    %369 = vmatprep.subr.bf16.mxu0 0
    %370 = vmatpush1.bf16.msra.mxu0 0
    %371 = vmatprep.subr.bf16.mxu0 0
    %372 = vmatpush1.bf16.msra.mxu0 0
    %373 = vmatprep.subr.bf16.mxu0 0
    %374 = vmatpush1.bf16.msra.mxu0 0
    %375 = vmatprep.subr.bf16.mxu0 0
    %376 = vmatpush1.bf16.msra.mxu0 0
    %377 = vmatprep.subr.bf16.mxu0 0
    %378 = vmatpush1.bf16.msra.mxu0 0
    %379 = vmatprep.subr.bf16.mxu0 0
    %380 = vmatpush1.bf16.msra.mxu0 0
    %381 = vmatprep.subr.bf16.mxu0 0
    %382 = vmatpush1.bf16.msra.mxu0 0
    %383 = vmatprep.subr.bf16.mxu0 0
    %384 = vmatpush1.bf16.msra.mxu0 0
    %385 = vmatprep.mubr.bf16.mxu0 0
    %386 = vmatmul.mubr.bf16.gmra.mrb[0].mxu0 %v269
    %v387 = vpop.f32.mrb[0].mxu0
    %v388 = vadd.f32 0.0, %v387
    %v389 = vpop.f32.mrb[0].mxu0
    %v390 = vadd.f32 0.0, %v389
    %v391 = vpop.f32.mrb[0].mxu0
    %v392 = vpop.f32.mrb[0].mxu0
    %393 = vdwg.mxu0
    %394 = vmatprep.subr.bf16.mxu0 %v210
    %395 = vmatpush1.bf16.msra.mxu0 %v209
    %396 = vmatprep.subr.bf16.mxu0 %v218
    %397 = vmatpush1.bf16.msra.mxu0 %v217
    %398 = vmatprep.subr.bf16.mxu0 %v226
    %399 = vmatpush1.bf16.msra.mxu0 %v225
    %400 = vmatprep.subr.bf16.mxu0 %v234
    %401 = vmatpush1.bf16.msra.mxu0 %v233
    %402 = vmatprep.subr.bf16.mxu0 0
    %403 = vmatpush1.bf16.msra.mxu0 0
    %404 = vmatprep.subr.bf16.mxu0 0
    %405 = vmatpush1.bf16.msra.mxu0 0
    %406 = vmatprep.subr.bf16.mxu0 0
    %407 = vmatpush1.bf16.msra.mxu0 0
    %408 = vmatprep.subr.bf16.mxu0 0
    %409 = vmatpush1.bf16.msra.mxu0 0
    %410 = vmatprep.subr.bf16.mxu0 0
    %411 = vmatpush1.bf16.msra.mxu0 0
    %412 = vmatprep.subr.bf16.mxu0 0
    %413 = vmatpush1.bf16.msra.mxu0 0
    %414 = vmatprep.subr.bf16.mxu0 0
    %415 = vmatpush1.bf16.msra.mxu0 0
    %416 = vmatprep.subr.bf16.mxu0 0
    %417 = vmatpush1.bf16.msra.mxu0 0
    %418 = vmatprep.subr.bf16.mxu0 0
    %419 = vmatpush1.bf16.msra.mxu0 0
    %420 = vmatprep.subr.bf16.mxu0 0
    %421 = vmatpush1.bf16.msra.mxu0 0
    %422 = vmatprep.subr.bf16.mxu0 0
    %423 = vmatpush1.bf16.msra.mxu0 0
    %424 = vmatprep.subr.bf16.mxu0 0
    %425 = vmatpush1.bf16.msra.mxu0 0
    %426 = vmatprep.mubr.bf16.mxu0 0
    %427 = vmatmul.mubr.bf16.gmra.mrb[0].mxu0 %v269
    %v428 = vpop.f32.mrb[0].mxu0
    %v429 = vadd.f32 0.0, %v428
    %v430 = vpop.f32.mrb[0].mxu0
    %v431 = vadd.f32 0.0, %v430
    %v432 = vpop.f32.mrb[0].mxu0
    %v433 = vpop.f32.mrb[0].mxu0
    %434 = vdwg.mxu0
    %v435 = vrot.slane %v306, 4
    %v436 = vadd.f32 %v306, %v435
    %v437 = vrot.slane %v436, 2
    %v438 = vadd.f32 %v436, %v437
    %v439 = vrot.slane %v438, 1
    %v440 = vadd.f32 %v438, %v439
    %v441 = vrot.slane %v308, 4
    %v442 = vadd.f32 %v308, %v441
    %v443 = vrot.slane %v442, 2
    %v444 = vadd.f32 %v442, %v443
    %v445 = vrot.slane %v444, 1
    %v446 = vadd.f32 %v444, %v445
    %v447 = vrot.slane %v347, 4
    %v448 = vadd.f32 %v347, %v447
    %v449 = vrot.slane %v448, 2
    %v450 = vadd.f32 %v448, %v449
    %v451 = vrot.slane %v450, 1
    %v452 = vadd.f32 %v450, %v451
    %v453 = vrot.slane %v349, 4
    %v454 = vadd.f32 %v349, %v453
    %v455 = vrot.slane %v454, 2
    %v456 = vadd.f32 %v454, %v455
    %v457 = vrot.slane %v456, 1
    %v458 = vadd.f32 %v456, %v457
    %v459 = vrot.slane %v388, 4
    %v460 = vadd.f32 %v388, %v459
    %v461 = vrot.slane %v460, 2
    %v462 = vadd.f32 %v460, %v461
    %v463 = vrot.slane %v462, 1
    %v464 = vadd.f32 %v462, %v463
    %v465 = vrot.slane %v390, 4
    %v466 = vadd.f32 %v390, %v465
    %v467 = vrot.slane %v466, 2
    %v468 = vadd.f32 %v466, %v467
    %v469 = vrot.slane %v468, 1
    %v470 = vadd.f32 %v468, %v469
    %v471 = vrot.slane %v429, 4
    %v472 = vadd.f32 %v429, %v471
    %v473 = vrot.slane %v472, 2
    %v474 = vadd.f32 %v472, %v473
    %v475 = vrot.slane %v474, 1
    %v476 = vadd.f32 %v474, %v475
    %v477 = vrot.slane %v431, 4
    %v478 = vadd.f32 %v431, %v477
    %v479 = vrot.slane %v478, 2
    %v480 = vadd.f32 %v478, %v479
    %v481 = vrot.slane %v480, 1
    %v482 = vadd.f32 %v480, %v481
    %v483 = vmul.f32 %v440, 0.125
    %v484 = vmul.f32 %v446, 0.125
    %v485 = vmul.f32 %v452, 0.125
    %v486 = vmul.f32 %v458, 0.125
    %v487 = vmul.f32 %v464, 0.125
    %v488 = vmul.f32 %v470, 0.125
    %v489 = vmul.f32 %v476, 0.125
    %v490 = vmul.f32 %v482, 0.125
    %v491 = vmul.f32 %v306, %v306
    %v492 = vmul.f32 %v308, %v308
    %v493 = vmul.f32 %v347, %v347
    %v494 = vmul.f32 %v349, %v349
    %v495 = vmul.f32 %v388, %v388
    %v496 = vmul.f32 %v390, %v390
    %v497 = vmul.f32 %v429, %v429
    %v498 = vmul.f32 %v431, %v431
    %v499 = vrot.slane %v491, 4
    %v500 = vadd.f32 %v491, %v499
    %v501 = vrot.slane %v500, 2
    %v502 = vadd.f32 %v500, %v501
    %v503 = vrot.slane %v502, 1
    %v504 = vadd.f32 %v502, %v503
    %v505 = vrot.slane %v492, 4
    %v506 = vadd.f32 %v492, %v505
    %v507 = vrot.slane %v506, 2
    %v508 = vadd.f32 %v506, %v507
    %v509 = vrot.slane %v508, 1
    %v510 = vadd.f32 %v508, %v509
    %v511 = vrot.slane %v493, 4
    %v512 = vadd.f32 %v493, %v511
    %v513 = vrot.slane %v512, 2
    %v514 = vadd.f32 %v512, %v513
    %v515 = vrot.slane %v514, 1
    %v516 = vadd.f32 %v514, %v515
    %v517 = vrot.slane %v494, 4
    %v518 = vadd.f32 %v494, %v517
    %v519 = vrot.slane %v518, 2
    %v520 = vadd.f32 %v518, %v519
    %v521 = vrot.slane %v520, 1
    %v522 = vadd.f32 %v520, %v521
    %v523 = vrot.slane %v495, 4
    %v524 = vadd.f32 %v495, %v523
    %v525 = vrot.slane %v524, 2
    %v526 = vadd.f32 %v524, %v525
    %v527 = vrot.slane %v526, 1
    %v528 = vadd.f32 %v526, %v527
    %v529 = vrot.slane %v496, 4
    %v530 = vadd.f32 %v496, %v529
    %v531 = vrot.slane %v530, 2
    %v532 = vadd.f32 %v530, %v531
    %v533 = vrot.slane %v532, 1
    %v534 = vadd.f32 %v532, %v533
    %v535 = vrot.slane %v497, 4
    %v536 = vadd.f32 %v497, %v535
    %v537 = vrot.slane %v536, 2
    %v538 = vadd.f32 %v536, %v537
    %v539 = vrot.slane %v538, 1
    %v540 = vadd.f32 %v538, %v539
    %v541 = vrot.slane %v498, 4
    %v542 = vadd.f32 %v498, %v541
    %v543 = vrot.slane %v542, 2
    %v544 = vadd.f32 %v542, %v543
    %v545 = vrot.slane %v544, 1
    %v546 = vadd.f32 %v544, %v545
    %v547 = vmul.f32 %v504, 0.125
    %v548 = vmul.f32 %v510, 0.125
    %v549 = vmul.f32 %v516, 0.125
    %v550 = vmul.f32 %v522, 0.125
    %v551 = vmul.f32 %v528, 0.125
    %v552 = vmul.f32 %v534, 0.125
    %v553 = vmul.f32 %v540, 0.125
    %v554 = vmul.f32 %v546, 0.125
    %v555 = vmul.f32 %v483, %v483
    %v556 = vmul.f32 %v484, %v484
    %v557 = vmul.f32 %v485, %v485
    %v558 = vmul.f32 %v486, %v486
    %v559 = vmul.f32 %v487, %v487
    %v560 = vmul.f32 %v488, %v488
    %v561 = vmul.f32 %v489, %v489
    %v562 = vmul.f32 %v490, %v490
    %v563 = vsub.f32 %v547, %v555
    %v564 = vsub.f32 %v548, %v556
    %v565 = vsub.f32 %v549, %v557
    %v566 = vsub.f32 %v550, %v558
    %v567 = vsub.f32 %v551, %v559
    %v568 = vsub.f32 %v552, %v560
    %v569 = vsub.f32 %v553, %v561
    %v570 = vsub.f32 %v554, %v562
    %v571 = vadd.f32 %v563, 1e-05
    %v572 = vadd.f32 %v564, 1e-05
    %v573 = vadd.f32 %v565, 1e-05
    %v574 = vadd.f32 %v566, 1e-05
    %v575 = vadd.f32 %v567, 1e-05
    %v576 = vadd.f32 %v568, 1e-05
    %v577 = vadd.f32 %v569, 1e-05
    %v578 = vadd.f32 %v570, 1e-05
    %v579 = vrsqrt.pop %v571
    %v580 = vrsqrt.pop %v572
    %v581 = vrsqrt.pop %v573
    %v582 = vrsqrt.pop %v574
    %v583 = vrsqrt.pop %v575
    %v584 = vrsqrt.pop %v576
    %v585 = vrsqrt.pop %v577
    %v586 = vrsqrt.pop %v578
    %v587 = vld [vmem:[#allocation7] sm:$0xff]
    %v596 = vcombine.low %v579, %v580
    %v597 = vcombine.low %v581, %v582
    %v598 = vcombine.low %v583, %v584
    %v599 = vcombine.low %v585, %v586
    %v601 = vunpack.c.l.s4 1966171168
    %v602 = vunpack.c.0.s8 %v601
    %v603 = vlaneseq
    %v604 = vshrl.u32 %v603, 7
    %v605 = vsub.s32 %v602, %v604
    %v606 = vrot.slane %v596, %v605
    %v608 = vunpack.c.l.s4 1966171168
    %v609 = vunpack.c.0.s8 %v608
    %v610 = vlaneseq
    %v611 = vshrl.u32 %v610, 7
    %v612 = vsub.s32 %v609, %v611
    %v613 = vrot.slane %v597, %v612
    %v615 = vunpack.c.l.s4 1966171168
    %v616 = vunpack.c.0.s8 %v615
    %v617 = vlaneseq
    %v618 = vshrl.u32 %v617, 7
    %v619 = vsub.s32 %v616, %v618
    %v620 = vrot.slane %v598, %v619
    %v622 = vunpack.c.l.s4 1966171168
    %v623 = vunpack.c.0.s8 %v622
    %v624 = vlaneseq
    %v625 = vshrl.u32 %v624, 7
    %v626 = vsub.s32 %v623, %v625
    %v627 = vrot.slane %v599, %v626
    %v628 = vcombine.low %v606, %v613
    %v629 = vcombine.low %v620, %v627
    %v631 = vunpack.c.l.s4 1966171168
    %v632 = vunpack.c.0.s8 %v631
    %v633 = vlaneseq
    %v634 = vshrl.u32 %v633, 7
    %v635 = vsub.s32 %v632, %v634
    %v636 = vrot.slane %v628, %v635
    %v638 = vunpack.c.l.s4 1966171168
    %v639 = vunpack.c.0.s8 %v638
    %v640 = vlaneseq
    %v641 = vshrl.u32 %v640, 7
    %v642 = vsub.s32 %v639, %v641
    %v643 = vrot.slane %v629, %v642
    %v644 = vcombine.low %v636, %v643
    %v646 = vmul.f32 %v587, %v644
    %v647 = vld [vmem:[%s3] sm:$0xff]
    %v649 = vlaneseq
    %v650 = vshrl.u32 %v649, 7
    %v651 = vsub.s32 0, %v650
    %v652 = vrot.slane %v646, %v651
    %v653 = vlaneseq
    %v654 = vshrl.u32 %v653, 7
    %v655 = vsub.s32 1, %v654
    %v656 = vrot.slane %v646, %v655
    %v657 = vlaneseq
    %v658 = vshrl.u32 %v657, 7
    %v659 = vsub.s32 2, %v658
    %v660 = vrot.slane %v646, %v659
    %v661 = vlaneseq
    %v662 = vshrl.u32 %v661, 7
    %v663 = vsub.s32 3, %v662
    %v664 = vrot.slane %v646, %v663
    %v665 = vlaneseq
    %v666 = vshrl.u32 %v665, 7
    %v667 = vsub.s32 4, %v666
    %v668 = vrot.slane %v646, %v667
    %v669 = vlaneseq
    %v670 = vshrl.u32 %v669, 7
    %v671 = vsub.s32 5, %v670
    %v672 = vrot.slane %v646, %v671
    %v673 = vlaneseq
    %v674 = vshrl.u32 %v673, 7
    %v675 = vsub.s32 6, %v674
    %v676 = vrot.slane %v646, %v675
    %v677 = vlaneseq
    %v678 = vshrl.u32 %v677, 7
    %v679 = vsub.s32 7, %v678
    %v680 = vrot.slane %v646, %v679
    %v689 = vmul.f32 %v483, %v652
    %v690 = vmul.f32 %v484, %v656
    %v691 = vmul.f32 %v485, %v660
    %v692 = vmul.f32 %v486, %v664
    %v693 = vmul.f32 %v487, %v668
    %v694 = vmul.f32 %v488, %v672
    %v695 = vmul.f32 %v489, %v676
    %v696 = vmul.f32 %v490, %v680
    %v705 = vcombine.low %v689, %v690
    %v706 = vcombine.low %v691, %v692
    %v707 = vcombine.low %v693, %v694
    %v708 = vcombine.low %v695, %v696
    %v710 = vunpack.c.l.s4 1966171168
    %v711 = vunpack.c.0.s8 %v710
    %v712 = vlaneseq
    %v713 = vshrl.u32 %v712, 7
    %v714 = vsub.s32 %v711, %v713
    %v715 = vrot.slane %v705, %v714
    %v717 = vunpack.c.l.s4 1966171168
    %v718 = vunpack.c.0.s8 %v717
    %v719 = vlaneseq
    %v720 = vshrl.u32 %v719, 7
    %v721 = vsub.s32 %v718, %v720
    %v722 = vrot.slane %v706, %v721
    %v724 = vunpack.c.l.s4 1966171168
    %v725 = vunpack.c.0.s8 %v724
    %v726 = vlaneseq
    %v727 = vshrl.u32 %v726, 7
    %v728 = vsub.s32 %v725, %v727
    %v729 = vrot.slane %v707, %v728
    %v731 = vunpack.c.l.s4 1966171168
    %v732 = vunpack.c.0.s8 %v731
    %v733 = vlaneseq
    %v734 = vshrl.u32 %v733, 7
    %v735 = vsub.s32 %v732, %v734
    %v736 = vrot.slane %v708, %v735
    %v737 = vcombine.low %v715, %v722
    %v738 = vcombine.low %v729, %v736
    %v740 = vunpack.c.l.s4 1966171168
    %v741 = vunpack.c.0.s8 %v740
    %v742 = vlaneseq
    %v743 = vshrl.u32 %v742, 7
    %v744 = vsub.s32 %v741, %v743
    %v745 = vrot.slane %v737, %v744
    %v747 = vunpack.c.l.s4 1966171168
    %v748 = vunpack.c.0.s8 %v747
    %v749 = vlaneseq
    %v750 = vshrl.u32 %v749, 7
    %v751 = vsub.s32 %v748, %v750
    %v752 = vrot.slane %v738, %v751
    %v753 = vcombine.low %v745, %v752
    %v755 = vsub.f32 %v647, %v753
    %v756 = vmul.f32 %v306, %v652
    %v757 = vmul.f32 %v308, %v656
    %v758 = vmul.f32 %v347, %v660
    %v759 = vmul.f32 %v349, %v664
    %v760 = vmul.f32 %v388, %v668
    %v761 = vmul.f32 %v390, %v672
    %v762 = vmul.f32 %v429, %v676
    %v763 = vmul.f32 %v431, %v680
    %v765 = vlaneseq
    %v766 = vshrl.u32 %v765, 7
    %v767 = vsub.s32 0, %v766
    %v768 = vrot.slane %v755, %v767
    %v769 = vlaneseq
    %v770 = vshrl.u32 %v769, 7
    %v771 = vsub.s32 1, %v770
    %v772 = vrot.slane %v755, %v771
    %v773 = vlaneseq
    %v774 = vshrl.u32 %v773, 7
    %v775 = vsub.s32 2, %v774
    %v776 = vrot.slane %v755, %v775
    %v777 = vlaneseq
    %v778 = vshrl.u32 %v777, 7
    %v779 = vsub.s32 3, %v778
    %v780 = vrot.slane %v755, %v779
    %v781 = vlaneseq
    %v782 = vshrl.u32 %v781, 7
    %v783 = vsub.s32 4, %v782
    %v784 = vrot.slane %v755, %v783
    %v785 = vlaneseq
    %v786 = vshrl.u32 %v785, 7
    %v787 = vsub.s32 5, %v786
    %v788 = vrot.slane %v755, %v787
    %v789 = vlaneseq
    %v790 = vshrl.u32 %v789, 7
    %v791 = vsub.s32 6, %v790
    %v792 = vrot.slane %v755, %v791
    %v793 = vlaneseq
    %v794 = vshrl.u32 %v793, 7
    %v795 = vsub.s32 7, %v794
    %v796 = vrot.slane %v755, %v795
    %v805 = vadd.f32 %v756, %v768
    %v806 = vadd.f32 %v757, %v772
    %v807 = vadd.f32 %v758, %v776
    %v808 = vadd.f32 %v759, %v780
    %v809 = vadd.f32 %v760, %v784
    %v810 = vadd.f32 %v761, %v788
    %v811 = vadd.f32 %v762, %v792
    %v812 = vadd.f32 %v763, %v796
    %v813 = vmul.f32 %v805, 0.2
    %v814 = vmul.f32 %v806, 0.2
    %v815 = vmul.f32 %v807, 0.2
    %v816 = vmul.f32 %v808, 0.2
    %v817 = vmul.f32 %v809, 0.2
    %v818 = vmul.f32 %v810, 0.2
    %v819 = vmul.f32 %v811, 0.2
    %v820 = vmul.f32 %v812, 0.2
    %v821 = vmax.f32 %v805, %v813
    %v822 = vmax.f32 %v806, %v814
    %v823 = vmax.f32 %v807, %v815
    %v824 = vmax.f32 %v808, %v816
    %v825 = vmax.f32 %v809, %v817
    %v826 = vmax.f32 %v810, %v818
    %v827 = vmax.f32 %v811, %v819
    %v828 = vmax.f32 %v812, %v820
    %v829 = vpack.c.bf16 %v821, %v821
    %v830 = vpack.c.bf16 %v822, %v822
    %v831 = vpack.c.bf16 %v823, %v823
    %v832 = vpack.c.bf16 %v824, %v824
    %v833 = vpack.c.bf16 %v825, %v825
    %v834 = vpack.c.bf16 %v826, %v826
    %v835 = vpack.c.bf16 %v827, %v827
    %v836 = vpack.c.bf16 %v828, %v828
    %v837 = vld [vmem:[#allocation8] sm:$0xf]
    %v838 = vld [vmem:[#allocation8 + $0x4] sm:$0xf]
    %v839 = vld [vmem:[#allocation8 + $0x8] sm:$0xf]
    %v840 = vld [vmem:[#allocation8 + $0xc] sm:$0xf]
    %v841 = vld [vmem:[#allocation8 + $0x10] sm:$0xf]
    %v842 = vld [vmem:[#allocation8 + $0x14] sm:$0xf]
    %v843 = vld [vmem:[#allocation8 + $0x18] sm:$0xf]
    %v844 = vld [vmem:[#allocation8 + $0x1c] sm:$0xf]
    %v845 = vld [vmem:[#allocation8 + $0x20] sm:$0xf]
    %v846 = vld [vmem:[#allocation8 + $0x24] sm:$0xf]
    %v847 = vld [vmem:[#allocation8 + $0x28] sm:$0xf]
    %v848 = vld [vmem:[#allocation8 + $0x2c] sm:$0xf]
    %v849 = vld [vmem:[#allocation8 + $0x30] sm:$0xf]
    %v850 = vld [vmem:[#allocation8 + $0x34] sm:$0xf]
    %v851 = vld [vmem:[#allocation8 + $0x38] sm:$0xf]
    %v852 = vld [vmem:[#allocation8 + $0x3c] sm:$0xf]
    %v853 = vld [vmem:[#allocation8 + $0x40] sm:$0xf]
    %v854 = vld [vmem:[#allocation8 + $0x44] sm:$0xf]
    %v855 = vld [vmem:[#allocation8 + $0x48] sm:$0xf]
    %v856 = vld [vmem:[#allocation8 + $0x4c] sm:$0xf]
    %v857 = vld [vmem:[#allocation8 + $0x50] sm:$0xf]
    %v858 = vld [vmem:[#allocation8 + $0x54] sm:$0xf]
    %v859 = vld [vmem:[#allocation8 + $0x58] sm:$0xf]
    %v860 = vld [vmem:[#allocation8 + $0x5c] sm:$0xf]
    %v861 = vld [vmem:[#allocation8 + $0x60] sm:$0xf]
    %v862 = vld [vmem:[#allocation8 + $0x64] sm:$0xf]
    %v863 = vld [vmem:[#allocation8 + $0x68] sm:$0xf]
    %v864 = vld [vmem:[#allocation8 + $0x6c] sm:$0xf]
    %v865 = vld [vmem:[#allocation8 + $0x70] sm:$0xf]
    %v866 = vld [vmem:[#allocation8 + $0x74] sm:$0xf]
    %v867 = vld [vmem:[#allocation8 + $0x78] sm:$0xf]
    %v868 = vld [vmem:[#allocation8 + $0x7c] sm:$0xf]
    %v869 = vld [vmem:[#allocation8 + $0x80] sm:$0xf]
    %v870 = vld [vmem:[#allocation8 + $0x84] sm:$0xf]
    %v871 = vld [vmem:[#allocation8 + $0x88] sm:$0xf]
    %v872 = vld [vmem:[#allocation8 + $0x8c] sm:$0xf]
    %v873 = vld [vmem:[#allocation8 + $0x90] sm:$0xf]
    %v874 = vld [vmem:[#allocation8 + $0x94] sm:$0xf]
    %v875 = vld [vmem:[#allocation8 + $0x98] sm:$0xf]
    %v876 = vld [vmem:[#allocation8 + $0x9c] sm:$0xf]
    %v877 = vld [vmem:[#allocation8 + $0xa0] sm:$0xf]
    %v878 = vld [vmem:[#allocation8 + $0xa4] sm:$0xf]
    %v879 = vld [vmem:[#allocation8 + $0xa8] sm:$0xf]
    %v880 = vld [vmem:[#allocation8 + $0xac] sm:$0xf]
    %v881 = vld [vmem:[#allocation8 + $0xb0] sm:$0xf]
    %v882 = vld [vmem:[#allocation8 + $0xb4] sm:$0xf]
    %v883 = vld [vmem:[#allocation8 + $0xb8] sm:$0xf]
    %v884 = vld [vmem:[#allocation8 + $0xbc] sm:$0xf]
    %v885 = vld [vmem:[#allocation8 + $0xc0] sm:$0xf]
    %v886 = vld [vmem:[#allocation8 + $0xc4] sm:$0xf]
    %v887 = vld [vmem:[#allocation8 + $0xc8] sm:$0xf]
    %v888 = vld [vmem:[#allocation8 + $0xcc] sm:$0xf]
    %v889 = vld [vmem:[#allocation8 + $0xd0] sm:$0xf]
    %v890 = vld [vmem:[#allocation8 + $0xd4] sm:$0xf]
    %v891 = vld [vmem:[#allocation8 + $0xd8] sm:$0xf]
    %v892 = vld [vmem:[#allocation8 + $0xdc] sm:$0xf]
    %v893 = vld [vmem:[#allocation8 + $0xe0] sm:$0xf]
    %v894 = vld [vmem:[#allocation8 + $0xe4] sm:$0xf]
    %v895 = vld [vmem:[#allocation8 + $0xe8] sm:$0xf]
    %v896 = vld [vmem:[#allocation8 + $0xec] sm:$0xf]
    %v897 = vld [vmem:[#allocation8 + $0xf0] sm:$0xf]
    %v898 = vld [vmem:[#allocation8 + $0xf4] sm:$0xf]
    %v899 = vld [vmem:[#allocation8 + $0xf8] sm:$0xf]
    %v900 = vld [vmem:[#allocation8 + $0xfc] sm:$0xf]
    %v901 = vld [vmem:[#allocation8 + $0x100] sm:$0xf]
    %v902 = vld [vmem:[#allocation8 + $0x104] sm:$0xf]
    %v903 = vld [vmem:[#allocation8 + $0x108] sm:$0xf]
    %v904 = vld [vmem:[#allocation8 + $0x10c] sm:$0xf]
    %v905 = vld [vmem:[#allocation8 + $0x110] sm:$0xf]
    %v906 = vld [vmem:[#allocation8 + $0x114] sm:$0xf]
    %v907 = vld [vmem:[#allocation8 + $0x118] sm:$0xf]
    %v908 = vld [vmem:[#allocation8 + $0x11c] sm:$0xf]
    %v909 = vld [vmem:[#allocation8 + $0x120] sm:$0xf]
    %v910 = vld [vmem:[#allocation8 + $0x124] sm:$0xf]
    %v911 = vld [vmem:[#allocation8 + $0x128] sm:$0xf]
    %v912 = vld [vmem:[#allocation8 + $0x12c] sm:$0xf]
    %v913 = vld [vmem:[#allocation8 + $0x130] sm:$0xf]
    %v914 = vld [vmem:[#allocation8 + $0x134] sm:$0xf]
    %v915 = vld [vmem:[#allocation8 + $0x138] sm:$0xf]
    %v916 = vld [vmem:[#allocation8 + $0x13c] sm:$0xf]
    %v917 = vld [vmem:[#allocation8 + $0x140] sm:$0xf]
    %v918 = vld [vmem:[#allocation8 + $0x144] sm:$0xf]
    %v919 = vld [vmem:[#allocation8 + $0x148] sm:$0xf]
    %v920 = vld [vmem:[#allocation8 + $0x14c] sm:$0xf]
    %v921 = vld [vmem:[#allocation8 + $0x150] sm:$0xf]
    %v922 = vld [vmem:[#allocation8 + $0x154] sm:$0xf]
    %v923 = vld [vmem:[#allocation8 + $0x158] sm:$0xf]
    %v924 = vld [vmem:[#allocation8 + $0x15c] sm:$0xf]
    %v925 = vld [vmem:[#allocation8 + $0x160] sm:$0xf]
    %v926 = vld [vmem:[#allocation8 + $0x164] sm:$0xf]
    %v927 = vld [vmem:[#allocation8 + $0x168] sm:$0xf]
    %v928 = vld [vmem:[#allocation8 + $0x16c] sm:$0xf]
    %v929 = vld [vmem:[#allocation8 + $0x170] sm:$0xf]
    %v930 = vld [vmem:[#allocation8 + $0x174] sm:$0xf]
    %v931 = vld [vmem:[#allocation8 + $0x178] sm:$0xf]
    %v932 = vld [vmem:[#allocation8 + $0x17c] sm:$0xf]
    %v933 = vld [vmem:[#allocation8 + $0x180] sm:$0xf]
    %v934 = vld [vmem:[#allocation8 + $0x184] sm:$0xf]
    %v935 = vld [vmem:[#allocation8 + $0x188] sm:$0xf]
    %v936 = vld [vmem:[#allocation8 + $0x18c] sm:$0xf]
    %v937 = vld [vmem:[#allocation8 + $0x190] sm:$0xf]
    %v938 = vld [vmem:[#allocation8 + $0x194] sm:$0xf]
    %v939 = vld [vmem:[#allocation8 + $0x198] sm:$0xf]
    %v940 = vld [vmem:[#allocation8 + $0x19c] sm:$0xf]
    %v941 = vld [vmem:[#allocation8 + $0x1a0] sm:$0xf]
    %v942 = vld [vmem:[#allocation8 + $0x1a4] sm:$0xf]
    %v943 = vld [vmem:[#allocation8 + $0x1a8] sm:$0xf]
    %v944 = vld [vmem:[#allocation8 + $0x1ac] sm:$0xf]
    %v945 = vld [vmem:[#allocation8 + $0x1b0] sm:$0xf]
    %v946 = vld [vmem:[#allocation8 + $0x1b4] sm:$0xf]
    %v947 = vld [vmem:[#allocation8 + $0x1b8] sm:$0xf]
    %v948 = vld [vmem:[#allocation8 + $0x1bc] sm:$0xf]
    %v949 = vld [vmem:[#allocation8 + $0x1c0] sm:$0xf]
    %v950 = vld [vmem:[#allocation8 + $0x1c4] sm:$0xf]
    %v951 = vld [vmem:[#allocation8 + $0x1c8] sm:$0xf]
    %v952 = vld [vmem:[#allocation8 + $0x1cc] sm:$0xf]
    %v953 = vld [vmem:[#allocation8 + $0x1d0] sm:$0xf]
    %v954 = vld [vmem:[#allocation8 + $0x1d4] sm:$0xf]
    %v955 = vld [vmem:[#allocation8 + $0x1d8] sm:$0xf]
    %v956 = vld [vmem:[#allocation8 + $0x1dc] sm:$0xf]
    %v957 = vld [vmem:[#allocation8 + $0x1e0] sm:$0xf]
    %v958 = vld [vmem:[#allocation8 + $0x1e4] sm:$0xf]
    %v959 = vld [vmem:[#allocation8 + $0x1e8] sm:$0xf]
    %v960 = vld [vmem:[#allocation8 + $0x1ec] sm:$0xf]
    %v961 = vld [vmem:[#allocation8 + $0x1f0] sm:$0xf]
    %v962 = vld [vmem:[#allocation8 + $0x1f4] sm:$0xf]
    %v963 = vld [vmem:[#allocation8 + $0x1f8] sm:$0xf]
    %v964 = vld [vmem:[#allocation8 + $0x1fc] sm:$0xf]
    %v1093 = vunpack.c.l.b16 %v837
    %v1094 = vunpack.c.l.b16 %v838
    %v1095 = vunpack.c.l.b16 %v839
    %v1096 = vunpack.c.l.b16 %v840
    %v1097 = vunpack.c.l.b16 %v841
    %v1098 = vunpack.c.l.b16 %v842
    %v1099 = vunpack.c.l.b16 %v843
    %v1100 = vunpack.c.l.b16 %v844
    %v1101 = vunpack.c.l.b16 %v845
    %v1102 = vunpack.c.l.b16 %v846
    %v1103 = vunpack.c.l.b16 %v847
    %v1104 = vunpack.c.l.b16 %v848
    %v1105 = vunpack.c.l.b16 %v849
    %v1106 = vunpack.c.l.b16 %v850
    %v1107 = vunpack.c.l.b16 %v851
    %v1108 = vunpack.c.l.b16 %v852
    %v1109 = vunpack.c.l.b16 %v853
    %v1110 = vunpack.c.l.b16 %v854
    %v1111 = vunpack.c.l.b16 %v855
    %v1112 = vunpack.c.l.b16 %v856
    %v1113 = vunpack.c.l.b16 %v857
    %v1114 = vunpack.c.l.b16 %v858
    %v1115 = vunpack.c.l.b16 %v859
    %v1116 = vunpack.c.l.b16 %v860
    %v1117 = vunpack.c.l.b16 %v861
    %v1118 = vunpack.c.l.b16 %v862
    %v1119 = vunpack.c.l.b16 %v863
    %v1120 = vunpack.c.l.b16 %v864
    %v1121 = vunpack.c.l.b16 %v865
    %v1122 = vunpack.c.l.b16 %v866
    %v1123 = vunpack.c.l.b16 %v867
    %v1124 = vunpack.c.l.b16 %v868
    %v1125 = vunpack.c.l.b16 %v869
    %v1126 = vunpack.c.l.b16 %v870
    %v1127 = vunpack.c.l.b16 %v871
    %v1128 = vunpack.c.l.b16 %v872
    %v1129 = vunpack.c.l.b16 %v873
    %v1130 = vunpack.c.l.b16 %v874
    %v1131 = vunpack.c.l.b16 %v875
    %v1132 = vunpack.c.l.b16 %v876
    %v1133 = vunpack.c.l.b16 %v877
    %v1134 = vunpack.c.l.b16 %v878
    %v1135 = vunpack.c.l.b16 %v879
    %v1136 = vunpack.c.l.b16 %v880
    %v1137 = vunpack.c.l.b16 %v881
    %v1138 = vunpack.c.l.b16 %v882
    %v1139 = vunpack.c.l.b16 %v883
    %v1140 = vunpack.c.l.b16 %v884
    %v1141 = vunpack.c.l.b16 %v885
    %v1142 = vunpack.c.l.b16 %v886
    %v1143 = vunpack.c.l.b16 %v887
    %v1144 = vunpack.c.l.b16 %v888
    %v1145 = vunpack.c.l.b16 %v889
    %v1146 = vunpack.c.l.b16 %v890
    %v1147 = vunpack.c.l.b16 %v891
    %v1148 = vunpack.c.l.b16 %v892
    %v1149 = vunpack.c.l.b16 %v893
    %v1150 = vunpack.c.l.b16 %v894
    %v1151 = vunpack.c.l.b16 %v895
    %v1152 = vunpack.c.l.b16 %v896
    %v1153 = vunpack.c.l.b16 %v897
    %v1154 = vunpack.c.l.b16 %v898
    %v1155 = vunpack.c.l.b16 %v899
    %v1156 = vunpack.c.l.b16 %v900
    %v1157 = vunpack.c.l.b16 %v901
    %v1158 = vunpack.c.l.b16 %v902
    %v1159 = vunpack.c.l.b16 %v903
    %v1160 = vunpack.c.l.b16 %v904
    %v1161 = vunpack.c.l.b16 %v905
    %v1162 = vunpack.c.l.b16 %v906
    %v1163 = vunpack.c.l.b16 %v907
    %v1164 = vunpack.c.l.b16 %v908
    %v1165 = vunpack.c.l.b16 %v909
    %v1166 = vunpack.c.l.b16 %v910
    %v1167 = vunpack.c.l.b16 %v911
    %v1168 = vunpack.c.l.b16 %v912
    %v1169 = vunpack.c.l.b16 %v913
    %v1170 = vunpack.c.l.b16 %v914
    %v1171 = vunpack.c.l.b16 %v915
    %v1172 = vunpack.c.l.b16 %v916
    %v1173 = vunpack.c.l.b16 %v917
    %v1174 = vunpack.c.l.b16 %v918
    %v1175 = vunpack.c.l.b16 %v919
    %v1176 = vunpack.c.l.b16 %v920
    %v1177 = vunpack.c.l.b16 %v921
    %v1178 = vunpack.c.l.b16 %v922
    %v1179 = vunpack.c.l.b16 %v923
    %v1180 = vunpack.c.l.b16 %v924
    %v1181 = vunpack.c.l.b16 %v925
    %v1182 = vunpack.c.l.b16 %v926
    %v1183 = vunpack.c.l.b16 %v927
    %v1184 = vunpack.c.l.b16 %v928
    %v1185 = vunpack.c.l.b16 %v929
    %v1186 = vunpack.c.l.b16 %v930
    %v1187 = vunpack.c.l.b16 %v931
    %v1188 = vunpack.c.l.b16 %v932
    %v1189 = vunpack.c.l.b16 %v933
    %v1190 = vunpack.c.l.b16 %v934
    %v1191 = vunpack.c.l.b16 %v935
    %v1192 = vunpack.c.l.b16 %v936
    %v1193 = vunpack.c.l.b16 %v937
    %v1194 = vunpack.c.l.b16 %v938
    %v1195 = vunpack.c.l.b16 %v939
    %v1196 = vunpack.c.l.b16 %v940
    %v1197 = vunpack.c.l.b16 %v941
    %v1198 = vunpack.c.l.b16 %v942
    %v1199 = vunpack.c.l.b16 %v943
    %v1200 = vunpack.c.l.b16 %v944
    %v1201 = vunpack.c.l.b16 %v945
    %v1202 = vunpack.c.l.b16 %v946
    %v1203 = vunpack.c.l.b16 %v947
    %v1204 = vunpack.c.l.b16 %v948
    %v1205 = vunpack.c.l.b16 %v949
    %v1206 = vunpack.c.l.b16 %v950
    %v1207 = vunpack.c.l.b16 %v951
    %v1208 = vunpack.c.l.b16 %v952
    %v1209 = vunpack.c.l.b16 %v953
    %v1210 = vunpack.c.l.b16 %v954
    %v1211 = vunpack.c.l.b16 %v955
    %v1212 = vunpack.c.l.b16 %v956
    %v1213 = vunpack.c.l.b16 %v957
    %v1214 = vunpack.c.l.b16 %v958
    %v1215 = vunpack.c.l.b16 %v959
    %v1216 = vunpack.c.l.b16 %v960
    %v1217 = vunpack.c.l.b16 %v961
    %v1218 = vunpack.c.l.b16 %v962
    %v1219 = vunpack.c.l.b16 %v963
    %v1220 = vunpack.c.l.b16 %v964
    %v1221 = vpack.c.b16 %v1094, %v1093
    %v1222 = vpack.c.b16 %v1096, %v1095
    %v1223 = vpack.c.b16 %v1098, %v1097
    %v1224 = vpack.c.b16 %v1100, %v1099
    %v1225 = vpack.c.b16 %v1102, %v1101
    %v1226 = vpack.c.b16 %v1104, %v1103
    %v1227 = vpack.c.b16 %v1106, %v1105
    %v1228 = vpack.c.b16 %v1108, %v1107
    %v1229 = vpack.c.b16 %v1110, %v1109
    %v1230 = vpack.c.b16 %v1112, %v1111
    %v1231 = vpack.c.b16 %v1114, %v1113
    %v1232 = vpack.c.b16 %v1116, %v1115
    %v1233 = vpack.c.b16 %v1118, %v1117
    %v1234 = vpack.c.b16 %v1120, %v1119
    %v1235 = vpack.c.b16 %v1122, %v1121
    %v1236 = vpack.c.b16 %v1124, %v1123
    %v1237 = vpack.c.b16 %v1126, %v1125
    %v1238 = vpack.c.b16 %v1128, %v1127
    %v1239 = vpack.c.b16 %v1130, %v1129
    %v1240 = vpack.c.b16 %v1132, %v1131
    %v1241 = vpack.c.b16 %v1134, %v1133
    %v1242 = vpack.c.b16 %v1136, %v1135
    %v1243 = vpack.c.b16 %v1138, %v1137
    %v1244 = vpack.c.b16 %v1140, %v1139
    %v1245 = vpack.c.b16 %v1142, %v1141
    %v1246 = vpack.c.b16 %v1144, %v1143
    %v1247 = vpack.c.b16 %v1146, %v1145
    %v1248 = vpack.c.b16 %v1148, %v1147
    %v1249 = vpack.c.b16 %v1150, %v1149
    %v1250 = vpack.c.b16 %v1152, %v1151
    %v1251 = vpack.c.b16 %v1154, %v1153
    %v1252 = vpack.c.b16 %v1156, %v1155
    %v1253 = vpack.c.b16 %v1158, %v1157
    %v1254 = vpack.c.b16 %v1160, %v1159
    %v1255 = vpack.c.b16 %v1162, %v1161
    %v1256 = vpack.c.b16 %v1164, %v1163
    %v1257 = vpack.c.b16 %v1166, %v1165
    %v1258 = vpack.c.b16 %v1168, %v1167
    %v1259 = vpack.c.b16 %v1170, %v1169
    %v1260 = vpack.c.b16 %v1172, %v1171
    %v1261 = vpack.c.b16 %v1174, %v1173
    %v1262 = vpack.c.b16 %v1176, %v1175
    %v1263 = vpack.c.b16 %v1178, %v1177
    %v1264 = vpack.c.b16 %v1180, %v1179
    %v1265 = vpack.c.b16 %v1182, %v1181
    %v1266 = vpack.c.b16 %v1184, %v1183
    %v1267 = vpack.c.b16 %v1186, %v1185
    %v1268 = vpack.c.b16 %v1188, %v1187
    %v1269 = vpack.c.b16 %v1190, %v1189
    %v1270 = vpack.c.b16 %v1192, %v1191
    %v1271 = vpack.c.b16 %v1194, %v1193
    %v1272 = vpack.c.b16 %v1196, %v1195
    %v1273 = vpack.c.b16 %v1198, %v1197
    %v1274 = vpack.c.b16 %v1200, %v1199
    %v1275 = vpack.c.b16 %v1202, %v1201
    %v1276 = vpack.c.b16 %v1204, %v1203
    %v1277 = vpack.c.b16 %v1206, %v1205
    %v1278 = vpack.c.b16 %v1208, %v1207
    %v1279 = vpack.c.b16 %v1210, %v1209
    %v1280 = vpack.c.b16 %v1212, %v1211
    %v1281 = vpack.c.b16 %v1214, %v1213
    %v1282 = vpack.c.b16 %v1216, %v1215
    %v1283 = vpack.c.b16 %v1218, %v1217
    %v1284 = vpack.c.b16 %v1220, %v1219
    %1349 = vmatprep.subr.bf16.mxu0 0
    %1350 = vmatpush1.bf16.msra.mxu0 %v1221
    %1351 = vmatprep.subr.bf16.mxu0 0
    %1352 = vmatpush1.bf16.msra.mxu0 %v1222
    %1353 = vmatprep.subr.bf16.mxu0 0
    %1354 = vmatpush1.bf16.msra.mxu0 %v1223
    %1355 = vmatprep.subr.bf16.mxu0 0
    %1356 = vmatpush1.bf16.msra.mxu0 %v1224
    %1357 = vmatprep.subr.bf16.mxu0 0
    %1358 = vmatpush1.bf16.msra.mxu0 %v1225
    %1359 = vmatprep.subr.bf16.mxu0 0
    %1360 = vmatpush1.bf16.msra.mxu0 %v1226
    %1361 = vmatprep.subr.bf16.mxu0 0
    %1362 = vmatpush1.bf16.msra.mxu0 %v1227
    %1363 = vmatprep.subr.bf16.mxu0 0
    %1364 = vmatpush1.bf16.msra.mxu0 %v1228
    %1365 = vmatprep.subr.bf16.mxu0 0
    %1366 = vmatpush1.bf16.msra.mxu0 %v1229
    %1367 = vmatprep.subr.bf16.mxu0 0
    %1368 = vmatpush1.bf16.msra.mxu0 %v1230
    %1369 = vmatprep.subr.bf16.mxu0 0
    %1370 = vmatpush1.bf16.msra.mxu0 %v1231
    %1371 = vmatprep.subr.bf16.mxu0 0
    %1372 = vmatpush1.bf16.msra.mxu0 %v1232
    %1373 = vmatprep.subr.bf16.mxu0 0
    %1374 = vmatpush1.bf16.msra.mxu0 %v1233
    %1375 = vmatprep.subr.bf16.mxu0 0
    %1376 = vmatpush1.bf16.msra.mxu0 %v1234
    %1377 = vmatprep.subr.bf16.mxu0 0
    %1378 = vmatpush1.bf16.msra.mxu0 %v1235
    %1379 = vmatprep.subr.bf16.mxu0 0
    %1380 = vmatpush1.bf16.msra.mxu0 %v1236
    %1381 = vmatprep.mubr.bf16.mxu0 %v830
    %1382 = vmatmul.mubr.bf16.gmra.mrb[0].mxu0 %v829
    %v1383 = vpop.f32.mrb[0].mxu0
    %v1384 = vadd.f32 0.0, %v1383
    %v1385 = vpop.f32.mrb[0].mxu0
    %v1386 = vpop.f32.mrb[0].mxu0
    %v1387 = vpop.f32.mrb[0].mxu0
    %1388 = vdwg.mxu0
    %1389 = vmatprep.subr.bf16.mxu0 0
    %1390 = vmatpush1.bf16.msra.mxu0 %v1237
    %1391 = vmatprep.subr.bf16.mxu0 0
    %1392 = vmatpush1.bf16.msra.mxu0 %v1238
    %1393 = vmatprep.subr.bf16.mxu0 0
    %1394 = vmatpush1.bf16.msra.mxu0 %v1239
    %1395 = vmatprep.subr.bf16.mxu0 0
    %1396 = vmatpush1.bf16.msra.mxu0 %v1240
    %1397 = vmatprep.subr.bf16.mxu0 0
    %1398 = vmatpush1.bf16.msra.mxu0 %v1241
    %1399 = vmatprep.subr.bf16.mxu0 0
    %1400 = vmatpush1.bf16.msra.mxu0 %v1242
    %1401 = vmatprep.subr.bf16.mxu0 0
    %1402 = vmatpush1.bf16.msra.mxu0 %v1243
    %1403 = vmatprep.subr.bf16.mxu0 0
    %1404 = vmatpush1.bf16.msra.mxu0 %v1244
    %1405 = vmatprep.subr.bf16.mxu0 0
    %1406 = vmatpush1.bf16.msra.mxu0 %v1245
    %1407 = vmatprep.subr.bf16.mxu0 0
    %1408 = vmatpush1.bf16.msra.mxu0 %v1246
    %1409 = vmatprep.subr.bf16.mxu0 0
    %1410 = vmatpush1.bf16.msra.mxu0 %v1247
    %1411 = vmatprep.subr.bf16.mxu0 0
    %1412 = vmatpush1.bf16.msra.mxu0 %v1248
    %1413 = vmatprep.subr.bf16.mxu0 0
    %1414 = vmatpush1.bf16.msra.mxu0 %v1249
    %1415 = vmatprep.subr.bf16.mxu0 0
    %1416 = vmatpush1.bf16.msra.mxu0 %v1250
    %1417 = vmatprep.subr.bf16.mxu0 0
    %1418 = vmatpush1.bf16.msra.mxu0 %v1251
    %1419 = vmatprep.subr.bf16.mxu0 0
    %1420 = vmatpush1.bf16.msra.mxu0 %v1252
    %1421 = vmatprep.mubr.bf16.mxu0 %v832
    %1422 = vmatmul.mubr.bf16.gmra.mrb[0].mxu0 %v831
    %v1423 = vpop.f32.mrb[0].mxu0
    %v1424 = vadd.f32 %v1384, %v1423
    %v1425 = vpop.f32.mrb[0].mxu0
    %v1426 = vpop.f32.mrb[0].mxu0
    %v1427 = vpop.f32.mrb[0].mxu0
    %1428 = vdwg.mxu0
    %1429 = vmatprep.subr.bf16.mxu0 0
    %1430 = vmatpush1.bf16.msra.mxu0 %v1253
    %1431 = vmatprep.subr.bf16.mxu0 0
    %1432 = vmatpush1.bf16.msra.mxu0 %v1254
    %1433 = vmatprep.subr.bf16.mxu0 0
    %1434 = vmatpush1.bf16.msra.mxu0 %v1255
    %1435 = vmatprep.subr.bf16.mxu0 0
    %1436 = vmatpush1.bf16.msra.mxu0 %v1256
    %1437 = vmatprep.subr.bf16.mxu0 0
    %1438 = vmatpush1.bf16.msra.mxu0 %v1257
    %1439 = vmatprep.subr.bf16.mxu0 0
    %1440 = vmatpush1.bf16.msra.mxu0 %v1258
    %1441 = vmatprep.subr.bf16.mxu0 0
    %1442 = vmatpush1.bf16.msra.mxu0 %v1259
    %1443 = vmatprep.subr.bf16.mxu0 0
    %1444 = vmatpush1.bf16.msra.mxu0 %v1260
    %1445 = vmatprep.subr.bf16.mxu0 0
    %1446 = vmatpush1.bf16.msra.mxu0 %v1261
    %1447 = vmatprep.subr.bf16.mxu0 0
    %1448 = vmatpush1.bf16.msra.mxu0 %v1262
    %1449 = vmatprep.subr.bf16.mxu0 0
    %1450 = vmatpush1.bf16.msra.mxu0 %v1263
    %1451 = vmatprep.subr.bf16.mxu0 0
    %1452 = vmatpush1.bf16.msra.mxu0 %v1264
    %1453 = vmatprep.subr.bf16.mxu0 0
    %1454 = vmatpush1.bf16.msra.mxu0 %v1265
    %1455 = vmatprep.subr.bf16.mxu0 0
    %1456 = vmatpush1.bf16.msra.mxu0 %v1266
    %1457 = vmatprep.subr.bf16.mxu0 0
    %1458 = vmatpush1.bf16.msra.mxu0 %v1267
    %1459 = vmatprep.subr.bf16.mxu0 0
    %1460 = vmatpush1.bf16.msra.mxu0 %v1268
    %1461 = vmatprep.mubr.bf16.mxu0 %v834
    %1462 = vmatmul.mubr.bf16.gmra.mrb[0].mxu0 %v833
    %v1463 = vpop.f32.mrb[0].mxu0
    %v1464 = vadd.f32 %v1424, %v1463
    %v1465 = vpop.f32.mrb[0].mxu0
    %v1466 = vpop.f32.mrb[0].mxu0
    %v1467 = vpop.f32.mrb[0].mxu0
    %1468 = vdwg.mxu0
    %1469 = vmatprep.subr.bf16.mxu0 0
    %1470 = vmatpush1.bf16.msra.mxu0 %v1269
    %1471 = vmatprep.subr.bf16.mxu0 0
    %1472 = vmatpush1.bf16.msra.mxu0 %v1270
    %1473 = vmatprep.subr.bf16.mxu0 0
    %1474 = vmatpush1.bf16.msra.mxu0 %v1271
    %1475 = vmatprep.subr.bf16.mxu0 0
    %1476 = vmatpush1.bf16.msra.mxu0 %v1272
    %1477 = vmatprep.subr.bf16.mxu0 0
    %1478 = vmatpush1.bf16.msra.mxu0 %v1273
    %1479 = vmatprep.subr.bf16.mxu0 0
    %1480 = vmatpush1.bf16.msra.mxu0 %v1274
    %1481 = vmatprep.subr.bf16.mxu0 0
    %1482 = vmatpush1.bf16.msra.mxu0 %v1275
    %1483 = vmatprep.subr.bf16.mxu0 0
    %1484 = vmatpush1.bf16.msra.mxu0 %v1276
    %1485 = vmatprep.subr.bf16.mxu0 0
    %1486 = vmatpush1.bf16.msra.mxu0 %v1277
    %1487 = vmatprep.subr.bf16.mxu0 0
    %1488 = vmatpush1.bf16.msra.mxu0 %v1278
    %1489 = vmatprep.subr.bf16.mxu0 0
    %1490 = vmatpush1.bf16.msra.mxu0 %v1279
    %1491 = vmatprep.subr.bf16.mxu0 0
    %1492 = vmatpush1.bf16.msra.mxu0 %v1280
    %1493 = vmatprep.subr.bf16.mxu0 0
    %1494 = vmatpush1.bf16.msra.mxu0 %v1281
    %1495 = vmatprep.subr.bf16.mxu0 0
    %1496 = vmatpush1.bf16.msra.mxu0 %v1282
    %1497 = vmatprep.subr.bf16.mxu0 0
    %1498 = vmatpush1.bf16.msra.mxu0 %v1283
    %1499 = vmatprep.subr.bf16.mxu0 0
    %1500 = vmatpush1.bf16.msra.mxu0 %v1284
    %1501 = vmatprep.mubr.bf16.mxu0 %v836
    %1502 = vmatmul.mubr.bf16.gmra.mrb[0].mxu0 %v835
    %v1503 = vpop.f32.mrb[0].mxu0
    %v1504 = vadd.f32 %v1464, %v1503
    %v1505 = vpop.f32.mrb[0].mxu0
    %v1506 = vpop.f32.mrb[0].mxu0
    %v1507 = vpop.f32.mrb[0].mxu0
    %1508 = vdwg.mxu0
    %v1509 = vlaneseq
    %v1510 = vand.u32 %v1509, 127
    %vm1511 = vcmp.lt.s32.totalorder %v1510, 10
    %v1512 = vsel %vm1511, %v1504, -1e+30
    %1513 = vmax.xlane.f32.xlu0 %v1512
    %v1514 = vpop.xlane.xlu0 %1513
    %v1515 = vsub.f32 %v1512, %v1514
    %v1516 = vmul.f32 %v1515, 1.442695
    %v1517 = vpow.pop %v1516
    %1518 = vadd.xlane.f32.xlu0 %v1517
    %v1519 = vpop.xlane.xlu0 %1518
    %v1520 = vrcp.pop %v1519
    %v1521 = vmul.f32 %v1517, %v1520
    %1522 = vst [vmem:[#allocation10] sm:$0xff] %v1521
    // Predicated region
    $region38: #{tpu_custom_call.1} parent=1 // pred_check
      _
    $region39: #{tpu_custom_call.1} parent=1 // pred_check_branch
      %1524 = sbr.rel (0) target = $region41
    $region40: #{tpu_custom_call.1} parent=1 // pred_region
      %s1526 = ssub.s32 128, 128
      %1527 = vsyncadd [#allocation4], %s1526
      %s1529 = sshll.u32 [#allocation10], 4
      %s1530 = int_to_ptr.vmem [resolvable:$true] %s1529
      %1532 = dma.vmem_to_hbm [thread:$0]  %s1530, 128, %s5, [#allocation4]
    $region41: #{tpu_custom_call.1} parent=1 // pred_fallthru
      _
    // Predicated region
    $region42: #{tpu_custom_call.1} parent=1 // pred_check
      _
    $region43: #{tpu_custom_call.1} parent=1 // pred_check_branch
      %1534 = sbr.rel (0) target = $region45
    $region44: #{tpu_custom_call.1} parent=1 // pred_region
      %1535 = dma.done [#allocation4], 128
    $region45: #{tpu_custom_call.1} parent=1 // pred_fallthru
      _
    %1536 = vsyncpa [#allocation3], 1
    %1537 = vsyncpa [#allocation6], 1
    %1538 = vsyncpa [#allocation9], 1
    %1539 = vsyncpa [#allocation4], 1

</llo_original>
